<compile_context>
chip_gen: v7x
topology: tpu7x:2x2x1
jax: 0.10.0
libtpu: 0.0.40
codegen_flags: <defaults>
</compile_context>

<pallas_src>
import functools

import jax
import jax.numpy as jnp
from jax import lax
from jax.experimental import pallas as pl
from jax.experimental.pallas import tpu as pltpu

NUM_DURATIONS = 60          # len(np.linspace(1.0, 0.5, 60)) in the module
ALPHA = 0.5                 # DeepHitSingleLoss(alpha=0.5, sigma=0.1)
SIGMA = 0.1
EPS = 1e-7                  # pycox nll_pmf epsilon
LANES = 128                 # lane-padded width (>= NUM_DURATIONS + 1)
TILE_J = 256                # pairwise column-block size (rows of the j block)


def _vmem_cap_bytes():
    # Generation-aware cap (<= ~75% of physical VMEM) with a safe fallback.
    try:
        cap = int(pltpu.get_tpu_info().vmem_capacity_bytes)
        if cap > 0:
            return int(0.75 * cap)
    except Exception:
        pass
    return 64 << 20


_VMEM_CAP = _vmem_cap_bytes()


def _loss_kernel(phi_ref, mt_ref, me_ref, w_ref,        # inputs (resident across j)
                 stats_ref, pmf_ref,                     # outputs (resident across j)
                 pmf_sc, packed_sc,                      # (B,L) softmax cache, (B,8) row cols
                 nll_sc, rank_sc, num_sc, den_sc,        # (1,1) accumulators
                 *, n_valid, num_dur, tile_j):
    j = pl.program_id(0)
    B, L = pmf_sc.shape
    T = num_dur
    T1 = T + 1

    # ---------------- per-row pass: softmax / NLL / risk (first grid step only) -----------
    @pl.when(j == 0)
    def _():
        phi = phi_ref[...]                                       # (B, L) f32, lanes > T are 0
        mt = mt_ref[...]                                         # (B, 1) int32, -1 = padding row
        me = me_ref[...]                                         # (B, 1) f32
        col = lax.broadcasted_iota(jnp.int32, (B, L), 1)
        lane_valid = jnp.where(col < T1, 1.0, 0.0)               # the real pad_col'ed width
        onehot = jnp.where(col == mt, 1.0, 0.0)
        cummask = jnp.where(col <= mt, 1.0, 0.0)

        gamma = jnp.max(phi, axis=1, keepdims=True)              # pad lanes are 0 == pad_col
        ephi = jnp.exp(phi - gamma) * lane_valid                 # zero beyond lane T
        sum_ = jnp.sum(ephi, axis=1, keepdims=True)
        inv_sum = pl.reciprocal(sum_, approx=True)               # EUP; internal loss math only
        phi_at = jnp.sum(phi * onehot, axis=1, keepdims=True)    # phi[b, mt[b]]
        cs_at = jnp.sum(ephi * cummask, axis=1, keepdims=True)   # cumsum[b, mt[b]]

        # nll_pmf (pycox), mean over the n_valid real rows (padding masked out)
        row_valid = jnp.where(mt >= 0, 1.0, 0.0)
        part1 = (phi_at - gamma) * me
        part2 = -jnp.log(jnp.maximum(sum_, 0.0) + EPS)
        part3 = jnp.log(jnp.maximum(sum_ - cs_at, 0.0) + EPS) * (1.0 - me)
        nll_sc[...] = jnp.sum(-(part1 + part2 + part3) * row_valid,
                              keepdims=True) * (1.0 / n_valid)
        rank_sc[...] = jnp.zeros_like(rank_sc)
        num_sc[...] = jnp.zeros_like(num_sc)
        den_sc[...] = jnp.zeros_like(den_sc)

        # softmax cache for the pairwise matmuls (approx reciprocal is fine here)
        pmf_sc[...] = ephi * inv_sum
        diag = cs_at * inv_sum                                   # F_i(T_i)

        # exact divide only for the values that leave the kernel (stored pmf / risk)
        pmf_exact = ephi / sum_
        risk = jnp.sum(pmf_exact * w_ref[...], axis=1, keepdims=True)     # (B, 1)

        # pack the per-row columns used by every pairwise step: [risk, mt, me, diag]
        lane8 = lax.broadcasted_iota(jnp.int32, (B, 8), 1)
        packed_sc[...] = jnp.where(
            lane8 == 0, risk,
            jnp.where(lane8 == 1, mt.astype(jnp.float32),
                      jnp.where(lane8 == 2, me,
                                jnp.where(lane8 == 3, diag, 0.0))))

        # torch.cat([pmf, risk[:, None]], 1): lanes >= T carry risk; wrapper slices (B0, T+1)
        pmf_ref[...] = jnp.where(col < T, pmf_exact, risk)

    # ---------------- pairwise block (rank loss + c-index) for column block j -------------
    jj = pl.multiple_of(j * tile_j, tile_j)
    pc = packed_sc[...]                                          # (B, 8)
    risk_i = pc[:, 0:1]
    mt_if = pc[:, 1:2]
    me_i = pc[:, 2:3]
    diag = pc[:, 3:4]

    # Exact row-orientation of [risk, mt, me] for the j block: identity @ block^T on the
    # MXU at HIGHEST precision (1.0 * x is bit-exact), so the risk tie test below compares
    # bit-identical values; no (B, B) broadcast buffer is materialized.
    blk = packed_sc[pl.ds(jj, tile_j), :]                        # (tj, 8)
    r8 = lax.broadcasted_iota(jnp.int32, (8, 8), 0)
    c8 = lax.broadcasted_iota(jnp.int32, (8, 8), 1)
    eye8 = jnp.where(r8 == c8, 1.0, 0.0)
    rows = lax.dot_general(eye8, blk, (((1,), (1,)), ((), ())),
                           precision=lax.Precision.HIGHEST,
                           preferred_element_type=jnp.float32)   # (8, tj) == blk^T
    risk_j = rows[0:1, :]                                        # (1, tj)
    mt_jf = rows[1:2, :]
    me_j = rows[2:3, :]

    # F_at_Ti[i, jb] = F_jb(T_i) = cummask_i . pmf_jb   (K = 128, MXU-aligned)
    col = lax.broadcasted_iota(jnp.int32, (B, L), 1)
    cummask = jnp.where(col <= mt_ref[...], 1.0, 0.0)            # (B, L)
    pmf_blk = pmf_sc[pl.ds(jj, tile_j), :]                       # (tj, L)
    F = lax.dot_general(cummask, pmf_blk, (((1,), (1,)), ((), ())),
                        preferred_element_type=jnp.float32)      # (B, tj)
    # TODO(synk): on v6e/v7x this matmul plus the pairwise exp below can run in bf16
    # (about 2x VPU/EUP throughput, half the VMEM) if ~1% tolerance on exp(-10*r) is OK.

    ti_lt = mt_if < mt_jf                                        # (B, tj) bool
    ti_eq = mt_if == mt_jf

    # rank_loss_deephit_single: sum_ij rank_mat[i,j] * exp(-r/sigma), r = F_i(T_i) - F_j(T_i)
    # rank_mat and the exp argument are fused; no standalone r / rank_mat buffers.
    rank_pair = jnp.where(ti_lt | (ti_eq & (me_j == 0.0)), me_i, 0.0)
    rank_sc[...] += jnp.sum(rank_pair * jnp.exp((F - diag) * (1.0 / SIGMA)),
                            keepdims=True)

    # Harrell-style c-index on risk (sigmoid dropped: monotone and risk lies in [0,1] so it
    # cannot saturate; tie handling differs mildly from lifelines for equal event times).
    num_sc[...] += jnp.sum(
        jnp.where(ti_lt,
                  jnp.where(risk_i < risk_j, me_i,
                            jnp.where(risk_i == risk_j, 0.5 * me_i, 0.0)),
                  0.0),
        keepdims=True)
    den_sc[...] += jnp.sum(jnp.where(ti_lt, me_i, 0.0), keepdims=True)

    # ---------------- finalize on the last grid step ---------------------------------------
    @pl.when(j == pl.num_programs(0) - 1)
    def _():
        rank = rank_sc[...] * (1.0 / (n_valid * n_valid))
        loss = ALPHA * nll_sc[...] + (1.0 - ALPHA) * rank
        cidx = num_sc[...] / jnp.maximum(den_sc[...], 1.0)
        lane = lax.broadcasted_iota(jnp.int32, (1, 128), 1)
        stats_ref[...] = jnp.where(lane == 0, loss, jnp.where(lane == 1, cidx, 0.0))


@jax.jit
def loss_forward(pred, mt, me):
    B0, T = pred.shape
    assert T == NUM_DURATIONS
    T1 = T + 1
    L = LANES

    # batch padding: multiple of 8 (f32 sublanes); multiple of the j tile when tiled.
    Bp8 = max(8, ((B0 + 7) // 8) * 8)
    if Bp8 <= TILE_J:
        TJ, Bp = Bp8, Bp8
    else:
        TJ = TILE_J
        Bp = ((B0 + TJ - 1) // TJ) * TJ
    nj = Bp // TJ

    # ---- preprocessing glue (matches the module) ----
    mt_v = jnp.reshape(jnp.squeeze(mt), (B0,)).astype(jnp.int32)
    me_v = jnp.reshape(jnp.squeeze(me), (B0,)).astype(jnp.float32)
    mt_v = jnp.clip(mt_v, 0, T)          # mt[mt < 0] = 0; upper guard at the pad column (pycox-legal)

    # pad_col (lane T == 0) + lane padding to 128; padded rows are all-zero / mt=-1 / me=0.
    phi = jnp.pad(pred.astype(jnp.float32), ((0, Bp - B0), (0, L - T)))
    mt_p = jnp.concatenate([mt_v, jnp.full((Bp - B0,), -1, jnp.int32)]).reshape(Bp, 1)
    me_p = jnp.concatenate([me_v, jnp.zeros((Bp - B0,), jnp.float32)]).reshape(Bp, 1)
    w = jnp.linspace(1.0, 0.5, T, dtype=jnp.float32)
    w_pad = jnp.concatenate([w, jnp.zeros((L - T,), jnp.float32)]).reshape(1, L)

    # VMEM budget from the actual live set: phi in + pmf out + pmf cache + cummask (Bp,L),
    # a few fused (Bp, TJ) pairwise temporaries, plus packed columns; generation-aware cap.
    est = 4 * (5 * Bp * L + 4 * Bp * TJ + 48 * Bp + 8 * 128)
    vmem_limit = int(min(_VMEM_CAP, max(2 << 20, 2 * est)))

    kernel = functools.partial(_loss_kernel, n_valid=B0, num_dur=T, tile_j=TJ)
    full = lambda shape: pl.BlockSpec(shape, lambda j: (0, 0))
    stats, pmf_out = pl.pallas_call(
        kernel,
        out_shape=(jax.ShapeDtypeStruct((1, 128), jnp.float32),   # [loss, c-index2, 0...]
                   jax.ShapeDtypeStruct((Bp, L), jnp.float32)),   # [pmf, risk] (lane-padded)
        grid=(nj,),
        in_specs=[
            full((Bp, L)),    # phi
            full((Bp, 1)),    # mt
            full((Bp, 1)),    # me
            full((1, L)),     # w
        ],
        out_specs=(full((1, 128)), full((Bp, L))),
        scratch_shapes=[
            pltpu.VMEM((Bp, L), jnp.float32),   # softmax(pad_col(pred)) cache
            pltpu.VMEM((Bp, 8), jnp.float32),   # packed per-row cols [risk, mt, me, diag]
            pltpu.VMEM((1, 1), jnp.float32),    # nll
            pltpu.VMEM((1, 1), jnp.float32),    # rank-loss sum
            pltpu.VMEM((1, 1), jnp.float32),    # c-index numerator
            pltpu.VMEM((1, 1), jnp.float32),    # c-index denominator
        ],
        compiler_params=pltpu.CompilerParams(
            dimension_semantics=("arbitrary",),   # j carries the accumulators
            vmem_limit_bytes=vmem_limit),
    )(phi, mt_p, me_p, w_pad)

    # TODO(synk): EvalSurv(...).concordance_td('antolini') (Kaplan-Meier censoring weights,
    # pandas step-function machinery) has no clean Pallas equivalent; NaN placeholder.
    return {
        "loss": stats[0, 0],
        "c-index": jnp.array(jnp.nan),
        "c-index2": stats[0, 1],
        "pmf": pmf_out[:B0, :T1],
    }


if __name__ == "__main__":
    key = jax.random.PRNGKey(0)
    k1, k2, k3 = jax.random.split(key, 3)
    B = 8
    pred = jax.random.normal(k1, (B, NUM_DURATIONS), dtype=jnp.float32)
    mt = jax.random.randint(k2, (B, 1), -2, NUM_DURATIONS)           # duration indices (some < 0)
    me = (jax.random.uniform(k3, (B, 1)) < 0.6).astype(jnp.float32)  # event indicators

    result = loss_forward(pred, mt, me)
    jax.block_until_ready(result)
    print("KERNEL_OK")
</pallas_src>

<mosaic_0001>
module attributes {stable_mosaic.version = 11 : i64} {
  func.func @_loss_kernel(%arg0: i32, %arg1: memref<8x128xf32, #tpu.memory_space<vmem>>, %arg2: memref<8x1xi32, #tpu.memory_space<vmem>>, %arg3: memref<8x1xf32, #tpu.memory_space<vmem>>, %arg4: memref<1x128xf32, #tpu.memory_space<vmem>>, %arg5: memref<1x128xf32, #tpu.memory_space<vmem>>, %arg6: memref<8x128xf32, #tpu.memory_space<vmem>>, %arg7: memref<8x128xf32, #tpu.memory_space<vmem>>, %arg8: memref<8x8xf32, #tpu.memory_space<vmem>>, %arg9: memref<1x1xf32, #tpu.memory_space<vmem>>, %arg10: memref<1x1xf32, #tpu.memory_space<vmem>>, %arg11: memref<1x1xf32, #tpu.memory_space<vmem>>, %arg12: memref<1x1xf32, #tpu.memory_space<vmem>>) attributes {dimension_semantics = [#tpu.dimension_semantics<arbitrary>], iteration_bounds = array<i64: 1>, scalar_prefetch = 0 : i64, scratch_operands = 6 : i64, tpu.core_type = #tpu.core_type<tc>, window_params = [{pipeline_mode = #tpu.pipeline_mode<synchronous>, transform_indices = @transform_0, window_bounds = array<i64: 8, 128>}, {pipeline_mode = #tpu.pipeline_mode<synchronous>, transform_indices = @transform_1, window_bounds = array<i64: 8, 1>}, {pipeline_mode = #tpu.pipeline_mode<synchronous>, transform_indices = @transform_2, window_bounds = array<i64: 8, 1>}, {pipeline_mode = #tpu.pipeline_mode<synchronous>, transform_indices = @transform_3, window_bounds = array<i64: 1, 128>}, {pipeline_mode = #tpu.pipeline_mode<synchronous>, transform_indices = @transform_4, window_bounds = array<i64: 1, 128>}, {pipeline_mode = #tpu.pipeline_mode<synchronous>, transform_indices = @transform_5, window_bounds = array<i64: 8, 128>}]} {
    %c0_i32 = arith.constant 0 : i32
    %0 = arith.cmpi eq, %arg0, %c0_i32 : i32
    %1 = arith.extui %0 : i1 to i32
    %c0_i32_0 = arith.constant 0 : i32
    %2 = arith.cmpi ne, %1, %c0_i32_0 : i32
    scf.if %2 {
      %c0_35 = arith.constant 0 : index
      %c0_36 = arith.constant 0 : index
      %101 = vector.load %arg1[%c0_35, %c0_36] : memref<8x128xf32, #tpu.memory_space<vmem>>, vector<8x128xf32>
      %c0_37 = arith.constant 0 : index
      %c0_38 = arith.constant 0 : index
      %102 = vector.load %arg2[%c0_37, %c0_38] : memref<8x1xi32, #tpu.memory_space<vmem>>, vector<8x1xi32>
      %c0_39 = arith.constant 0 : index
      %c0_40 = arith.constant 0 : index
      %103 = vector.load %arg3[%c0_39, %c0_40] : memref<8x1xf32, #tpu.memory_space<vmem>>, vector<8x1xf32>
      %104 = tpu.iota {dimensions = array<i32: 1>} : vector<8x128xi32>
      %c61_i32 = arith.constant 61 : i32
      %105 = vector.broadcast %c61_i32 : i32 to vector<8x128xi32>
      %106 = arith.cmpi slt, %104, %105 : vector<8x128xi32>
      %cst_41 = arith.constant 1.000000e+00 : f32
      %cst_42 = arith.constant 0.000000e+00 : f32
      %107 = vector.broadcast %cst_41 : f32 to vector<8x128xf32>
      %108 = vector.broadcast %cst_42 : f32 to vector<8x128xf32>
      %109 = arith.select %106, %107, %108 : vector<8x128xi1>, vector<8x128xf32>
      %110 = vector.broadcast %102 : vector<8x1xi32> to vector<8x128xi32>
      %111 = arith.cmpi eq, %104, %110 : vector<8x128xi32>
      %cst_43 = arith.constant 1.000000e+00 : f32
      %cst_44 = arith.constant 0.000000e+00 : f32
      %112 = vector.broadcast %cst_43 : f32 to vector<8x128xf32>
      %113 = vector.broadcast %cst_44 : f32 to vector<8x128xf32>
      %114 = arith.select %111, %112, %113 : vector<8x128xi1>, vector<8x128xf32>
      %115 = vector.broadcast %102 : vector<8x1xi32> to vector<8x128xi32>
      %116 = arith.cmpi sle, %104, %115 : vector<8x128xi32>
      %cst_45 = arith.constant 1.000000e+00 : f32
      %cst_46 = arith.constant 0.000000e+00 : f32
      %117 = vector.broadcast %cst_45 : f32 to vector<8x128xf32>
      %118 = vector.broadcast %cst_46 : f32 to vector<8x128xf32>
      %119 = arith.select %116, %117, %118 : vector<8x128xi1>, vector<8x128xf32>
      %cst_47 = arith.constant dense<0xFF800000> : vector<8xf32>
      %120 = vector.multi_reduction <maximumf>, %101, %cst_47 [1] : vector<8x128xf32> to vector<8xf32>
      %121 = vector.shape_cast %120 : vector<8xf32> to vector<8x1xf32>
      %122 = vector.broadcast %121 : vector<8x1xf32> to vector<8x128xf32>
      %123 = arith.subf %101, %122 : vector<8x128xf32>
      %124 = math.exp %123 : vector<8x128xf32>
      %125 = arith.mulf %124, %109 : vector<8x128xf32>
      %cst_48 = arith.constant dense<0.000000e+00> : vector<8xf32>
      %126 = vector.multi_reduction <add>, %125, %cst_48 [1] : vector<8x128xf32> to vector<8xf32>
      %127 = vector.shape_cast %126 : vector<8xf32> to vector<8x1xf32>
      %128 = tpu.reciprocal %127 {approx = true} : vector<8x1xf32> -> vector<8x1xf32>
      %129 = arith.mulf %101, %114 : vector<8x128xf32>
      %cst_49 = arith.constant dense<0.000000e+00> : vector<8xf32>
      %130 = vector.multi_reduction <add>, %129, %cst_49 [1] : vector<8x128xf32> to vector<8xf32>
      %131 = vector.shape_cast %130 : vector<8xf32> to vector<8x1xf32>
      %132 = arith.mulf %125, %119 : vector<8x128xf32>
      %cst_50 = arith.constant dense<0.000000e+00> : vector<8xf32>
      %133 = vector.multi_reduction <add>, %132, %cst_50 [1] : vector<8x128xf32> to vector<8xf32>
      %134 = vector.shape_cast %133 : vector<8xf32> to vector<8x1xf32>
      %c0_i32_51 = arith.constant 0 : i32
      %135 = vector.broadcast %c0_i32_51 : i32 to vector<8x1xi32>
      %136 = arith.cmpi sge, %102, %135 : vector<8x1xi32>
      %cst_52 = arith.constant 1.000000e+00 : f32
      %cst_53 = arith.constant 0.000000e+00 : f32
      %137 = vector.broadcast %cst_52 : f32 to vector<8x1xf32>
      %138 = vector.broadcast %cst_53 : f32 to vector<8x1xf32>
      %139 = arith.select %136, %137, %138 : vector<8x1xi1>, vector<8x1xf32>
      %140 = arith.subf %131, %121 : vector<8x1xf32>
      %141 = arith.mulf %140, %103 : vector<8x1xf32>
      %cst_54 = arith.constant 0.000000e+00 : f32
      %142 = vector.broadcast %cst_54 : f32 to vector<8x1xf32>
      %143 = arith.maximumf %127, %142 : vector<8x1xf32>
      %cst_55 = arith.constant 1.000000e-07 : f32
      %144 = vector.broadcast %cst_55 : f32 to vector<8x1xf32>
      %145 = arith.addf %143, %144 : vector<8x1xf32>
      %146 = math.log %145 : vector<8x1xf32>
      %cst_56 = arith.constant 0.000000e+00 : f32
      %147 = vector.broadcast %cst_56 : f32 to vector<8x1xf32>
      %148 = arith.subf %147, %146 : vector<8x1xf32>
      %149 = arith.subf %127, %134 : vector<8x1xf32>
      %cst_57 = arith.constant 0.000000e+00 : f32
      %150 = vector.broadcast %cst_57 : f32 to vector<8x1xf32>
      %151 = arith.maximumf %149, %150 : vector<8x1xf32>
      %cst_58 = arith.constant 1.000000e-07 : f32
      %152 = vector.broadcast %cst_58 : f32 to vector<8x1xf32>
      %153 = arith.addf %151, %152 : vector<8x1xf32>
      %154 = math.log %153 : vector<8x1xf32>
      %cst_59 = arith.constant 1.000000e+00 : f32
      %155 = vector.broadcast %cst_59 : f32 to vector<8x1xf32>
      %156 = arith.subf %155, %103 : vector<8x1xf32>
      %157 = arith.mulf %154, %156 : vector<8x1xf32>
      %158 = arith.addf %141, %148 : vector<8x1xf32>
      %159 = arith.addf %158, %157 : vector<8x1xf32>
      %cst_60 = arith.constant 0.000000e+00 : f32
      %160 = vector.broadcast %cst_60 : f32 to vector<8x1xf32>
      %161 = arith.subf %160, %159 : vector<8x1xf32>
      %162 = arith.mulf %161, %139 : vector<8x1xf32>
      %163 = vector.shape_cast %162 : vector<8x1xf32> to vector<1x8x1xf32>
      %cst_61 = arith.constant dense<0.000000e+00> : vector<1xf32>
      %164 = vector.multi_reduction <add>, %163, %cst_61 [1, 2] : vector<1x8x1xf32> to vector<1xf32>
      %165 = vector.shape_cast %164 : vector<1xf32> to vector<1x1x1xf32>
      %166 = vector.extract %165[0, 0, 0] : f32 from vector<1x1x1xf32>
      %167 = vector.broadcast %166 : f32 to vector<1x1xf32>
      %cst_62 = arith.constant 1.250000e-01 : f32
      %168 = vector.broadcast %cst_62 : f32 to vector<1x1xf32>
      %169 = arith.mulf %167, %168 : vector<1x1xf32>
      %c0_63 = arith.constant 0 : index
      %c0_64 = arith.constant 0 : index
      %170 = vector.load %arg9[%c0_63, %c0_64] : memref<1x1xf32, #tpu.memory_space<vmem>>, vector<1x1xf32>
      tpu.vector_store %arg9[%c0_63, %c0_64], %169 {strides = array<i32>} : memref<1x1xf32, #tpu.memory_space<vmem>>, vector<1x1xf32>,
      %cst_65 = arith.constant 0.000000e+00 : f32
      %171 = vector.broadcast %cst_65 : f32 to vector<1x1xf32>
      %c0_66 = arith.constant 0 : index
      %c0_67 = arith.constant 0 : index
      %172 = vector.load %arg10[%c0_66, %c0_67] : memref<1x1xf32, #tpu.memory_space<vmem>>, vector<1x1xf32>
      tpu.vector_store %arg10[%c0_66, %c0_67], %171 {strides = array<i32>} : memref<1x1xf32, #tpu.memory_space<vmem>>, vector<1x1xf32>,
      %cst_68 = arith.constant 0.000000e+00 : f32
      %173 = vector.broadcast %cst_68 : f32 to vector<1x1xf32>
      %c0_69 = arith.constant 0 : index
      %c0_70 = arith.constant 0 : index
      %174 = vector.load %arg11[%c0_69, %c0_70] : memref<1x1xf32, #tpu.memory_space<vmem>>, vector<1x1xf32>
      tpu.vector_store %arg11[%c0_69, %c0_70], %173 {strides = array<i32>} : memref<1x1xf32, #tpu.memory_space<vmem>>, vector<1x1xf32>,
      %cst_71 = arith.constant 0.000000e+00 : f32
      %175 = vector.broadcast %cst_71 : f32 to vector<1x1xf32>
      %c0_72 = arith.constant 0 : index
      %c0_73 = arith.constant 0 : index
      %176 = vector.load %arg12[%c0_72, %c0_73] : memref<1x1xf32, #tpu.memory_space<vmem>>, vector<1x1xf32>
      tpu.vector_store %arg12[%c0_72, %c0_73], %175 {strides = array<i32>} : memref<1x1xf32, #tpu.memory_space<vmem>>, vector<1x1xf32>,
      %177 = vector.broadcast %128 : vector<8x1xf32> to vector<8x128xf32>
      %178 = arith.mulf %125, %177 : vector<8x128xf32>
      %c0_74 = arith.constant 0 : index
      %c0_75 = arith.constant 0 : index
      %179 = vector.load %arg7[%c0_74, %c0_75] : memref<8x128xf32, #tpu.memory_space<vmem>>, vector<8x128xf32>
      tpu.vector_store %arg7[%c0_74, %c0_75], %178 {strides = array<i32>} : memref<8x128xf32, #tpu.memory_space<vmem>>, vector<8x128xf32>,
      %180 = arith.mulf %134, %128 : vector<8x1xf32>
      %181 = vector.broadcast %127 : vector<8x1xf32> to vector<8x128xf32>
      %182 = arith.divf %125, %181 : vector<8x128xf32>
      %c0_76 = arith.constant 0 : index
      %c0_77 = arith.constant 0 : index
      %183 = vector.load %arg4[%c0_76, %c0_77] : memref<1x128xf32, #tpu.memory_space<vmem>>, vector<1x128xf32>
      %184 = vector.broadcast %183 : vector<1x128xf32> to vector<8x128xf32>
      %185 = arith.mulf %182, %184 : vector<8x128xf32>
      %cst_78 = arith.constant dense<0.000000e+00> : vector<8xf32>
      %186 = vector.multi_reduction <add>, %185, %cst_78 [1] : vector<8x128xf32> to vector<8xf32>
      %187 = vector.shape_cast %186 : vector<8xf32> to vector<8x1xf32>
      %188 = tpu.iota {dimensions = array<i32: 1>} : vector<8x8xi32>
      %c0_i32_79 = arith.constant 0 : i32
      %189 = vector.broadcast %c0_i32_79 : i32 to vector<8x8xi32>
      %190 = arith.cmpi eq, %188, %189 : vector<8x8xi32>
      %c1_i32 = arith.constant 1 : i32
      %191 = vector.broadcast %c1_i32 : i32 to vector<8x8xi32>
      %192 = arith.cmpi eq, %188, %191 : vector<8x8xi32>
      %193 = arith.sitofp %102 : vector<8x1xi32> to vector<8x1xf32>
      %c2_i32 = arith.constant 2 : i32
      %194 = vector.broadcast %c2_i32 : i32 to vector<8x8xi32>
      %195 = arith.cmpi eq, %188, %194 : vector<8x8xi32>
      %c3_i32 = arith.constant 3 : i32
      %196 = vector.broadcast %c3_i32 : i32 to vector<8x8xi32>
      %197 = arith.cmpi eq, %188, %196 : vector<8x8xi32>
      %cst_80 = arith.constant 0.000000e+00 : f32
      %198 = vector.shape_cast %180 : vector<8x1xf32> to vector<8x1xf32>
      %199 = vector.broadcast %198 : vector<8x1xf32> to vector<8x8xf32>
      %200 = vector.broadcast %cst_80 : f32 to vector<8x8xf32>
      %201 = arith.select %197, %199, %200 : vector<8x8xi1>, vector<8x8xf32>
      %202 = vector.shape_cast %103 : vector<8x1xf32> to vector<8x1xf32>
      %203 = vector.broadcast %202 : vector<8x1xf32> to vector<8x8xf32>
      %204 = arith.select %195, %203, %201 : vector<8x8xi1>, vector<8x8xf32>
      %205 = vector.shape_cast %193 : vector<8x1xf32> to vector<8x1xf32>
      %206 = vector.broadcast %205 : vector<8x1xf32> to vector<8x8xf32>
      %207 = arith.select %192, %206, %204 : vector<8x8xi1>, vector<8x8xf32>
      %208 = vector.shape_cast %187 : vector<8x1xf32> to vector<8x1xf32>
      %209 = vector.broadcast %208 : vector<8x1xf32> to vector<8x8xf32>
      %210 = arith.select %190, %209, %207 : vector<8x8xi1>, vector<8x8xf32>
      %c0_81 = arith.constant 0 : index
      %c0_82 = arith.constant 0 : index
      %211 = vector.load %arg8[%c0_81, %c0_82] : memref<8x8xf32, #tpu.memory_space<vmem>>, vector<8x8xf32>
      tpu.vector_store %arg8[%c0_81, %c0_82], %210 {strides = array<i32>} : memref<8x8xf32, #tpu.memory_space<vmem>>, vector<8x8xf32>,
      %c60_i32 = arith.constant 60 : i32
      %212 = vector.broadcast %c60_i32 : i32 to vector<8x128xi32>
      %213 = arith.cmpi slt, %104, %212 : vector<8x128xi32>
      %214 = vector.shape_cast %187 : vector<8x1xf32> to vector<8x1xf32>
      %215 = vector.broadcast %214 : vector<8x1xf32> to vector<8x128xf32>
      %216 = arith.select %213, %182, %215 : vector<8x128xi1>, vector<8x128xf32>
      %c0_83 = arith.constant 0 : index
      %c0_84 = arith.constant 0 : index
      %217 = vector.load %arg6[%c0_83, %c0_84] : memref<8x128xf32, #tpu.memory_space<vmem>>, vector<8x128xf32>
      tpu.vector_store %arg6[%c0_83, %c0_84], %216 {strides = array<i32>} : memref<8x128xf32, #tpu.memory_space<vmem>>, vector<8x128xf32>,
    } else {
    }
    %c8_i32 = arith.constant 8 : i32
    %3 = arith.muli %arg0, %c8_i32 : i32
    %4 = tpu.assume_multiple %3, 8 : i32
    %c0 = arith.constant 0 : index
    %c0_1 = arith.constant 0 : index
    %5 = vector.load %arg8[%c0, %c0_1] : memref<8x8xf32, #tpu.memory_space<vmem>>, vector<8x8xf32>
    %6 = vector.extract_strided_slice %5 {offsets = [0, 0], sizes = [8, 1], strides = [1, 1]} : vector<8x8xf32> to vector<8x1xf32>
    %7 = vector.extract_strided_slice %5 {offsets = [0, 1], sizes = [8, 1], strides = [1, 1]} : vector<8x8xf32> to vector<8x1xf32>
    %8 = vector.extract_strided_slice %5 {offsets = [0, 2], sizes = [8, 1], strides = [1, 1]} : vector<8x8xf32> to vector<8x1xf32>
    %9 = vector.extract_strided_slice %5 {offsets = [0, 3], sizes = [8, 1], strides = [1, 1]} : vector<8x8xf32> to vector<8x1xf32>
    %10 = arith.index_cast %4 : i32 to index
    %c0_2 = arith.constant 0 : index
    %11 = vector.load %arg8[%10, %c0_2] : memref<8x8xf32, #tpu.memory_space<vmem>>, vector<8x8xf32>
    %12 = tpu.iota {dimensions = array<i32: 0>} : vector<8x8xi32>
    %13 = tpu.iota {dimensions = array<i32: 1>} : vector<8x8xi32>
    %14 = arith.cmpi eq, %12, %13 : vector<8x8xi32>
    %cst = arith.constant 1.000000e+00 : f32
    %cst_3 = arith.constant 0.000000e+00 : f32
    %15 = vector.broadcast %cst : f32 to vector<8x8xf32>
    %16 = vector.broadcast %cst_3 : f32 to vector<8x8xf32>
    %17 = arith.select %14, %15, %16 : vector<8x8xi1>, vector<8x8xf32>
    %cst_4 = arith.constant dense<0.000000e+00> : vector<8x8xf32>
    %18 = tpu.matmul %17, %11, %cst_4 {dimension_numbers = #tpu.dot_dimension_numbers<[1], [1], [0], [0], [0, 0, 1, 0], [], []>, precision = #tpu.contract_precision<fp32>} : vector<8x8xf32>, vector<8x8xf32>, vector<8x8xf32> -> vector<8x8xf32>
    %19 = vector.extract_strided_slice %18 {offsets = [0, 0], sizes = [1, 8], strides = [1, 1]} : vector<8x8xf32> to vector<1x8xf32>
    %20 = vector.extract_strided_slice %18 {offsets = [1, 0], sizes = [1, 8], strides = [1, 1]} : vector<8x8xf32> to vector<1x8xf32>
    %21 = vector.extract_strided_slice %18 {offsets = [2, 0], sizes = [1, 8], strides = [1, 1]} : vector<8x8xf32> to vector<1x8xf32>
    %22 = tpu.iota {dimensions = array<i32: 1>} : vector<8x128xi32>
    %c0_5 = arith.constant 0 : index
    %c0_6 = arith.constant 0 : index
    %23 = vector.load %arg2[%c0_5, %c0_6] : memref<8x1xi32, #tpu.memory_space<vmem>>, vector<8x1xi32>
    %24 = vector.broadcast %23 : vector<8x1xi32> to vector<8x128xi32>
    %25 = arith.cmpi sle, %22, %24 : vector<8x128xi32>
    %cst_7 = arith.constant 1.000000e+00 : f32
    %cst_8 = arith.constant 0.000000e+00 : f32
    %26 = vector.broadcast %cst_7 : f32 to vector<8x128xf32>
    %27 = vector.broadcast %cst_8 : f32 to vector<8x128xf32>
    %28 = arith.select %25, %26, %27 : vector<8x128xi1>, vector<8x128xf32>
    %29 = arith.index_cast %4 : i32 to index
    %c0_9 = arith.constant 0 : index
    %30 = vector.load %arg7[%29, %c0_9] : memref<8x128xf32, #tpu.memory_space<vmem>>, vector<8x128xf32>
    %cst_10 = arith.constant dense<0.000000e+00> : vector<8x8xf32>
    %31 = tpu.matmul %28, %30, %cst_10 {dimension_numbers = #tpu.dot_dimension_numbers<[1], [1], [0], [0], [0, 0, 1, 0], [], []>} : vector<8x128xf32>, vector<8x128xf32>, vector<8x8xf32> -> vector<8x8xf32>
    %32 = vector.broadcast %7 : vector<8x1xf32> to vector<8x8xf32>
    %33 = vector.broadcast %20 : vector<1x8xf32> to vector<8x8xf32>
    %34 = arith.cmpf olt, %32, %33 : vector<8x8xf32>
    %35 = vector.broadcast %7 : vector<8x1xf32> to vector<8x8xf32>
    %36 = vector.broadcast %20 : vector<1x8xf32> to vector<8x8xf32>
    %37 = arith.cmpf oeq, %35, %36 : vector<8x8xf32>
    %cst_11 = arith.constant 0.000000e+00 : f32
    %38 = vector.broadcast %cst_11 : f32 to vector<1x8xf32>
    %39 = arith.cmpf oeq, %21, %38 : vector<1x8xf32>
    %40 = vector.broadcast %39 : vector<1x8xi1> to vector<8x8xi1>
    %41 = arith.andi %37, %40 : vector<8x8xi1>
    %42 = arith.ori %34, %41 : vector<8x8xi1>
    %cst_12 = arith.constant 0.000000e+00 : f32
    %43 = vector.shape_cast %8 : vector<8x1xf32> to vector<8x1xf32>
    %44 = vector.broadcast %43 : vector<8x1xf32> to vector<8x8xf32>
    %45 = vector.broadcast %cst_12 : f32 to vector<8x8xf32>
    %46 = arith.select %42, %44, %45 : vector<8x8xi1>, vector<8x8xf32>
    %c0_13 = arith.constant 0 : index
    %c0_14 = arith.constant 0 : index
    %47 = vector.load %arg10[%c0_13, %c0_14] : memref<1x1xf32, #tpu.memory_space<vmem>>, vector<1x1xf32>
    %48 = vector.broadcast %9 : vector<8x1xf32> to vector<8x8xf32>
    %49 = arith.subf %31, %48 : vector<8x8xf32>
    %cst_15 = arith.constant 1.000000e+01 : f32
    %50 = vector.broadcast %cst_15 : f32 to vector<8x8xf32>
    %51 = arith.mulf %49, %50 : vector<8x8xf32>
    %52 = math.exp %51 : vector<8x8xf32>
    %53 = arith.mulf %46, %52 : vector<8x8xf32>
    %54 = vector.shape_cast %53 : vector<8x8xf32> to vector<1x8x8xf32>
    %cst_16 = arith.constant dense<0.000000e+00> : vector<1xf32>
    %55 = vector.multi_reduction <add>, %54, %cst_16 [1, 2] : vector<1x8x8xf32> to vector<1xf32>
    %56 = vector.shape_cast %55 : vector<1xf32> to vector<1x1x1xf32>
    %57 = vector.extract %56[0, 0, 0] : f32 from vector<1x1x1xf32>
    %58 = vector.broadcast %57 : f32 to vector<1x1xf32>
    %59 = arith.addf %47, %58 : vector<1x1xf32>
    %c0_17 = arith.constant 0 : index
    %c0_18 = arith.constant 0 : index
    %60 = vector.load %arg10[%c0_17, %c0_18] : memref<1x1xf32, #tpu.memory_space<vmem>>, vector<1x1xf32>
    tpu.vector_store %arg10[%c0_17, %c0_18], %59 {strides = array<i32>} : memref<1x1xf32, #tpu.memory_space<vmem>>, vector<1x1xf32>,
    %c0_19 = arith.constant 0 : index
    %c0_20 = arith.constant 0 : index
    %61 = vector.load %arg11[%c0_19, %c0_20] : memref<1x1xf32, #tpu.memory_space<vmem>>, vector<1x1xf32>
    %62 = vector.broadcast %6 : vector<8x1xf32> to vector<8x8xf32>
    %63 = vector.broadcast %19 : vector<1x8xf32> to vector<8x8xf32>
    %64 = arith.cmpf olt, %62, %63 : vector<8x8xf32>
    %65 = vector.broadcast %6 : vector<8x1xf32> to vector<8x8xf32>
    %66 = vector.broadcast %19 : vector<1x8xf32> to vector<8x8xf32>
    %67 = arith.cmpf oeq, %65, %66 : vector<8x8xf32>
    %cst_21 = arith.constant 5.000000e-01 : f32
    %68 = vector.broadcast %cst_21 : f32 to vector<8x1xf32>
    %69 = arith.mulf %68, %8 : vector<8x1xf32>
    %cst_22 = arith.constant 0.000000e+00 : f32
    %70 = vector.shape_cast %69 : vector<8x1xf32> to vector<8x1xf32>
    %71 = vector.broadcast %70 : vector<8x1xf32> to vector<8x8xf32>
    %72 = vector.broadcast %cst_22 : f32 to vector<8x8xf32>
    %73 = arith.select %67, %71, %72 : vector<8x8xi1>, vector<8x8xf32>
    %74 = vector.shape_cast %8 : vector<8x1xf32> to vector<8x1xf32>
    %75 = vector.broadcast %74 : vector<8x1xf32> to vector<8x8xf32>
    %76 = arith.select %64, %75, %73 : vector<8x8xi1>, vector<8x8xf32>
    %cst_23 = arith.constant 0.000000e+00 : f32
    %77 = vector.broadcast %cst_23 : f32 to vector<8x8xf32>
    %78 = arith.select %34, %76, %77 : vector<8x8xi1>, vector<8x8xf32>
    %79 = vector.shape_cast %78 : vector<8x8xf32> to vector<1x8x8xf32>
    %cst_24 = arith.constant dense<0.000000e+00> : vector<1xf32>
    %80 = vector.multi_reduction <add>, %79, %cst_24 [1, 2] : vector<1x8x8xf32> to vector<1xf32>
    %81 = vector.shape_cast %80 : vector<1xf32> to vector<1x1x1xf32>
    %82 = vector.extract %81[0, 0, 0] : f32 from vector<1x1x1xf32>
    %83 = vector.broadcast %82 : f32 to vector<1x1xf32>
    %84 = arith.addf %61, %83 : vector<1x1xf32>
    %c0_25 = arith.constant 0 : index
    %c0_26 = arith.constant 0 : index
    %85 = vector.load %arg11[%c0_25, %c0_26] : memref<1x1xf32, #tpu.memory_space<vmem>>, vector<1x1xf32>
    tpu.vector_store %arg11[%c0_25, %c0_26], %84 {strides = array<i32>} : memref<1x1xf32, #tpu.memory_space<vmem>>, vector<1x1xf32>,
    %c0_27 = arith.constant 0 : index
    %c0_28 = arith.constant 0 : index
    %86 = vector.load %arg12[%c0_27, %c0_28] : memref<1x1xf32, #tpu.memory_space<vmem>>, vector<1x1xf32>
    %cst_29 = arith.constant 0.000000e+00 : f32
    %87 = vector.shape_cast %8 : vector<8x1xf32> to vector<8x1xf32>
    %88 = vector.broadcast %87 : vector<8x1xf32> to vector<8x8xf32>
    %89 = vector.broadcast %cst_29 : f32 to vector<8x8xf32>
    %90 = arith.select %34, %88, %89 : vector<8x8xi1>, vector<8x8xf32>
    %91 = vector.shape_cast %90 : vector<8x8xf32> to vector<1x8x8xf32>
    %cst_30 = arith.constant dense<0.000000e+00> : vector<1xf32>
    %92 = vector.multi_reduction <add>, %91, %cst_30 [1, 2] : vector<1x8x8xf32> to vector<1xf32>
    %93 = vector.shape_cast %92 : vector<1xf32> to vector<1x1x1xf32>
    %94 = vector.extract %93[0, 0, 0] : f32 from vector<1x1x1xf32>
    %95 = vector.broadcast %94 : f32 to vector<1x1xf32>
    %96 = arith.addf %86, %95 : vector<1x1xf32>
    %c0_31 = arith.constant 0 : index
    %c0_32 = arith.constant 0 : index
    %97 = vector.load %arg12[%c0_31, %c0_32] : memref<1x1xf32, #tpu.memory_space<vmem>>, vector<1x1xf32>
    tpu.vector_store %arg12[%c0_31, %c0_32], %96 {strides = array<i32>} : memref<1x1xf32, #tpu.memory_space<vmem>>, vector<1x1xf32>,
    %c0_i32_33 = arith.constant 0 : i32
    %98 = arith.cmpi eq, %arg0, %c0_i32_33 : i32
    %99 = arith.extui %98 : i1 to i32
    %c0_i32_34 = arith.constant 0 : i32
    %100 = arith.cmpi ne, %99, %c0_i32_34 : i32
    scf.if %100 {
      %c0_35 = arith.constant 0 : index
      %c0_36 = arith.constant 0 : index
      %101 = vector.load %arg10[%c0_35, %c0_36] : memref<1x1xf32, #tpu.memory_space<vmem>>, vector<1x1xf32>
      %cst_37 = arith.constant 1.562500e-02 : f32
      %102 = vector.broadcast %cst_37 : f32 to vector<1x1xf32>
      %103 = arith.mulf %101, %102 : vector<1x1xf32>
      %c0_38 = arith.constant 0 : index
      %c0_39 = arith.constant 0 : index
      %104 = vector.load %arg9[%c0_38, %c0_39] : memref<1x1xf32, #tpu.memory_space<vmem>>, vector<1x1xf32>
      %cst_40 = arith.constant 5.000000e-01 : f32
      %105 = vector.broadcast %cst_40 : f32 to vector<1x1xf32>
      %106 = arith.mulf %105, %104 : vector<1x1xf32>
      %cst_41 = arith.constant 5.000000e-01 : f32
      %107 = vector.broadcast %cst_41 : f32 to vector<1x1xf32>
      %108 = arith.mulf %107, %103 : vector<1x1xf32>
      %109 = arith.addf %106, %108 : vector<1x1xf32>
      %c0_42 = arith.constant 0 : index
      %c0_43 = arith.constant 0 : index
      %110 = vector.load %arg11[%c0_42, %c0_43] : memref<1x1xf32, #tpu.memory_space<vmem>>, vector<1x1xf32>
      %c0_44 = arith.constant 0 : index
      %c0_45 = arith.constant 0 : index
      %111 = vector.load %arg12[%c0_44, %c0_45] : memref<1x1xf32, #tpu.memory_space<vmem>>, vector<1x1xf32>
      %cst_46 = arith.constant 1.000000e+00 : f32
      %112 = vector.broadcast %cst_46 : f32 to vector<1x1xf32>
      %113 = arith.maximumf %111, %112 : vector<1x1xf32>
      %114 = arith.divf %110, %113 : vector<1x1xf32>
      %115 = tpu.iota {dimensions = array<i32: 1>} : vector<1x128xi32>
      %c0_i32_47 = arith.constant 0 : i32
      %116 = vector.broadcast %c0_i32_47 : i32 to vector<1x128xi32>
      %117 = arith.cmpi eq, %115, %116 : vector<1x128xi32>
      %c1_i32 = arith.constant 1 : i32
      %118 = vector.broadcast %c1_i32 : i32 to vector<1x128xi32>
      %119 = arith.cmpi eq, %115, %118 : vector<1x128xi32>
      %cst_48 = arith.constant 0.000000e+00 : f32
      %120 = vector.shape_cast %114 : vector<1x1xf32> to vector<1x1xf32>
      %121 = vector.broadcast %120 : vector<1x1xf32> to vector<1x128xf32>
      %122 = vector.broadcast %cst_48 : f32 to vector<1x128xf32>
      %123 = arith.select %119, %121, %122 : vector<1x128xi1>, vector<1x128xf32>
      %124 = vector.shape_cast %109 : vector<1x1xf32> to vector<1x1xf32>
      %125 = vector.broadcast %124 : vector<1x1xf32> to vector<1x128xf32>
      %126 = arith.select %117, %125, %123 : vector<1x128xi1>, vector<1x128xf32>
      %c0_49 = arith.constant 0 : index
      %c0_50 = arith.constant 0 : index
      %127 = vector.load %arg5[%c0_49, %c0_50] : memref<1x128xf32, #tpu.memory_space<vmem>>, vector<1x128xf32>
      tpu.vector_store %arg5[%c0_49, %c0_50], %126 {strides = array<i32>} : memref<1x128xf32, #tpu.memory_space<vmem>>, vector<1x128xf32>,
    } else {
    }
    return
  }
  func.func @transform_0(%arg0: i32) -> (i32, i32) {
    %c0_i32 = arith.constant 0 : i32
    %c0_i32_0 = arith.constant 0 : i32
    %c0_i32_1 = arith.constant 0 : i32
    return %c0_i32, %c0_i32_0 : i32, i32
  }
  func.func @transform_1(%arg0: i32) -> (i32, i32) {
    %c0_i32 = arith.constant 0 : i32
    %c0_i32_0 = arith.constant 0 : i32
    %c0_i32_1 = arith.constant 0 : i32
    return %c0_i32, %c0_i32_0 : i32, i32
  }
  func.func @transform_2(%arg0: i32) -> (i32, i32) {
    %c0_i32 = arith.constant 0 : i32
    %c0_i32_0 = arith.constant 0 : i32
    %c0_i32_1 = arith.constant 0 : i32
    return %c0_i32, %c0_i32_0 : i32, i32
  }
  func.func @transform_3(%arg0: i32) -> (i32, i32) {
    %c0_i32 = arith.constant 0 : i32
    %c0_i32_0 = arith.constant 0 : i32
    %c0_i32_1 = arith.constant 0 : i32
    return %c0_i32, %c0_i32_0 : i32, i32
  }
  func.func @transform_4(%arg0: i32) -> (i32, i32) {
    %c0_i32 = arith.constant 0 : i32
    %c0_i32_0 = arith.constant 0 : i32
    %c0_i32_1 = arith.constant 0 : i32
    return %c0_i32, %c0_i32_0 : i32, i32
  }
  func.func @transform_5(%arg0: i32) -> (i32, i32) {
    %c0_i32 = arith.constant 0 : i32
    %c0_i32_0 = arith.constant 0 : i32
    %c0_i32_1 = arith.constant 0 : i32
    return %c0_i32, %c0_i32_0 : i32, i32
  }
}

</mosaic_0001>

<llo_original>
// kernel: loss_forward.1
$region0: #{loss_forward.1}
  #allocation0 [shape = 'u32[]', space=smem, size = 0x4, offset = 0x4, fixed_abs, tag = 'smem constant byte address 0x4 - core index']
  #allocation1 [shape = 'u32[144,128]{1,0:T(1,128)}', space=vmem, size = 0x12000, scoped, tag = 'internal scratch']
  #allocation2 [shape = 'f32[8,128]{1,0:T(8,128)}', space=vmem, size = 0x1000, scoped, tag = 'scratch operand']
  #allocation3 [shape = 'f32[8,8]{1,0:T(8,128)}', space=vmem, size = 0x1000, scoped, tag = 'scratch operand']
  #allocation4 [shape = 'f32[1,1]{1,0:T(1,128)}', space=vmem, size = 0x200, scoped, tag = 'scratch operand']
  #allocation5 [shape = 'f32[1,1]{1,0:T(1,128)}', space=vmem, size = 0x200, scoped, tag = 'scratch operand']
  #allocation6 [shape = 'f32[1,1]{1,0:T(1,128)}', space=vmem, size = 0x200, scoped, tag = 'scratch operand']
  #allocation7 [shape = 'f32[1,1]{1,0:T(1,128)}', space=vmem, size = 0x200, scoped, tag = 'scratch operand']
  %s0 = inlined_call_operand.vmem [shape: f32[8,128], index: 0, kind: input, shape index: {}]
  %s1 = inlined_call_operand.vmem [shape: s32[8,1], index: 1, kind: input, shape index: {}]
  %s2 = inlined_call_operand.vmem [shape: f32[8,1], index: 2, kind: input, shape index: {}]
  %s3 = inlined_call_operand.vmem [shape: f32[1,128], index: 3, kind: input, shape index: {}]
  %s4 = inlined_call_operand.vmem [shape: f32[1,128], index: 4, kind: output, shape index: {0}]
  %s5 = inlined_call_operand.hbm [shape: f32[8,128], index: 5, kind: output, shape index: {1}]
  %6 = xla_tuple %s4, %s5
  %s7 = sld [smem:[#allocation0]]
  $region42: #{loss_forward.1} parent=0
    _
  %s9 = ssub.s32 1, %s7
  %s10 = scalar_select 0, %s9, %s7
  $region1: #{loss_forward.1} parent=0
    #allocation8 [shape = 'u8[4096]{0}', space=vmem, size = 0x1000, scoped, tag = 'output window, operand 1, single buffered']
    #allocation9 [shape = 's32[1]{0}', space=sflag, size = 0x4, scoped, tag = 'scoped memory for loss_forward.1']
    %11 = vsyncpa [#allocation9], 0
    // Predicated region
    $region2: #{loss_forward.1} parent=1 // pred_check
      _
    $region3: #{loss_forward.1} parent=1 // pred_check_branch
      %13 = sbr.rel (0) target = $region5
    $region4: #{loss_forward.1} parent=1 // pred_region
      _
    $region5: #{loss_forward.1} parent=1 // pred_fallthru
      _
    // Predicated region
    $region6: #{loss_forward.1} parent=1 // pred_check
      _
    $region7: #{loss_forward.1} parent=1 // pred_check_branch
      %15 = sbr.rel (0) target = $region9
    $region8: #{loss_forward.1} parent=1 // pred_region
      _
    $region9: #{loss_forward.1} parent=1 // pred_fallthru
      _
    // Predicated region
    $region10: #{loss_forward.1} parent=1 // pred_check
      _
    $region11: #{loss_forward.1} parent=1 // pred_check_branch
      %17 = sbr.rel (0) target = $region13
    $region12: #{loss_forward.1} parent=1 // pred_region
      _
    $region13: #{loss_forward.1} parent=1 // pred_fallthru
      _
    // Predicated region
    $region14: #{loss_forward.1} parent=1 // pred_check
      _
    $region15: #{loss_forward.1} parent=1 // pred_check_branch
      %19 = sbr.rel (0) target = $region17
    $region16: #{loss_forward.1} parent=1 // pred_region
      _
    $region17: #{loss_forward.1} parent=1 // pred_fallthru
      _
    %p20 = scmp.eq.s32.totalorder 0, 0
    // Predicated region
    $region18: #{loss_forward.1} parent=1 // pred_check
      %p21 = pneg %p20
    $region19: #{loss_forward.1} parent=1 // pred_check_branch
      %23 = sbr.rel (%p21) target = $region21
    $region20: #{loss_forward.1} parent=1 // pred_region
      %v24 = vld [vmem:[%s0] sm:$0xff]
      %v25 = vld [vmem:[%s1] sm:$0xff]
      %v26 = vld [vmem:[%s2] sm:$0xff]
      %v27 = vlaneseq
      %v28 = vand.u32 %v27, 127
      %vm29 = vcmp.lt.s32.totalorder %v28, 61
      %v30 = vsel %vm29, 1.0, 0.0
      %31 = vset.pattern.permute.xlu0 0
      %32 = vperm.xlu0 %31, %v25
      %v33 = vpop.permute.xlu0 %32
      %vm34 = vcmp.eq.s32.totalorder %v28, %v33
      %v35 = vsel %vm34, 1.0, 0.0
      %vm36 = vcmp.le.s32.totalorder %v28, %v33
      %v37 = vsel %vm36, 1.0, 0.0
      %38 = vmax.xlane.f32.xlu0 %v24
      %v39 = vpop.xlane.xlu0 %38
      %v40 = vsub.f32 %v24, %v39
      %v41 = vmul.f32 %v40, 1.442695
      %v42 = vpow.pop %v41
      %v43 = vmul.f32 %v42, %v30
      %44 = vadd.xlane.f32.xlu0 %v43
      %v45 = vpop.xlane.xlu0 %44
      %v46 = vrcp.pop %v45
      %v47 = vmul.f32 %v24, %v35
      %48 = vadd.xlane.f32.xlu0 %v47
      %v49 = vpop.xlane.xlu0 %48
      %v50 = vmul.f32 %v43, %v37
      %51 = vadd.xlane.f32.xlu0 %v50
      %v52 = vpop.xlane.xlu0 %51
      %vm53 = vcmp.ge.s32.totalorder %v25, 0
      %v54 = vsel %vm53, 1.0, 0.0
      %v55 = vsub.f32 %v49, %v39
      %v56 = vmul.f32 %v55, %v26
      %v57 = vmax.f32 %v45, 0.0
      %v58 = vadd.f32 %v57, 1e-07
      %v59 = vlog2.pop %v58
      %v60 = vmul.f32 %v59, 0.6931472
      %v61 = vsub.f32 0.0, %v60
      %v62 = vsub.f32 %v45, %v52
      %v63 = vmax.f32 %v62, 0.0
      %v64 = vadd.f32 %v63, 1e-07
      %v65 = vlog2.pop %v64
      %v66 = vmul.f32 %v65, 0.6931472
      %v67 = vsub.f32 1.0, %v26
      %v68 = vmul.f32 %v66, %v67
      %v69 = vadd.f32 %v56, %v61
      %v70 = vadd.f32 %v69, %v68
      %v71 = vsub.f32 0.0, %v70
      %v72 = vmul.f32 %v71, %v54
      %vm73 = vcmask 7168
      %v74 = vsel %vm73, %v72, 0.0
      %75 = vadd.xlane.f32.xlu0 %v74
      %v76 = vpop.xlane.xlu0 %75
      %v77 = vrot.slane %v76, 4
      %v78 = vadd.f32 %v76, %v77
      %v79 = vrot.slane %v78, 2
      %v80 = vadd.f32 %v78, %v79
      %v81 = vrot.slane %v80, 1
      %v82 = vadd.f32 %v80, %v81
      %s83 = vtos %v82
      %v84 = vstv %s83
      %v85 = vmul.f32 %v84, 0.125
      %vm86 = vcmask 0
      %87 = vst.msk [vmem:[#allocation4] sm:$0x1] %vm86, %v85
      %88 = vst.msk [vmem:[#allocation5] sm:$0x1] %vm86, 0.0
      %89 = vst.msk [vmem:[#allocation6] sm:$0x1] %vm86, 0.0
      %90 = vst.msk [vmem:[#allocation7] sm:$0x1] %vm86, 0.0
      %v91 = vmul.f32 %v43, %v46
      %92 = vst [vmem:[#allocation2] sm:$0xff] %v91
      %v93 = vmul.f32 %v52, %v46
      %v94 = vrcp.pop %v45
      %v95 = vmul.f32 %v43, %v94
      %v96 = vld [vmem:[%s3] sm:$0x1]
      %v98 = vlaneseq
      %v99 = vshrl.u32 %v98, 7
      %v100 = vsub.s32 0, %v99
      %v101 = vrot.slane %v96, %v100
      %v103 = vmul.f32 %v95, %v101
      %104 = vadd.xlane.f32.xlu0 %v103
      %v105 = vpop.xlane.xlu0 %104
      %vm106 = vcmp.eq.s32.totalorder %v28, 0
      %vm107 = vcmp.eq.s32.totalorder %v28, 1
      %v108 = vcvt.s32.f32 %v25
      %vm109 = vcmp.eq.s32.totalorder %v28, 2
      %vm110 = vcmp.eq.s32.totalorder %v28, 3
      %v111 = vsel %vm110, %v93, 0.0
      %113 = vset.pattern.permute.xlu0 0
      %114 = vperm.xlu0 %113, %v26
      %v115 = vpop.permute.xlu0 %114
      %v117 = vsel %vm109, %v115, %v111
      %119 = vset.pattern.permute.xlu0 0
      %120 = vperm.xlu0 %119, %v108
      %v121 = vpop.permute.xlu0 %120
      %v123 = vsel %vm107, %v121, %v117
      %v124 = vsel %vm106, %v105, %v123
      %vm125 = vcmask 64512
      %126 = vst.msk [vmem:[#allocation3] sm:$0xff] %vm125, %v124
      %vm127 = vcmp.lt.s32.totalorder %v28, 60
      %v128 = vsel %vm127, %v95, %v105
      %129 = vst [vmem:[#allocation8] sm:$0xff] %v128
    $region21: #{loss_forward.1} parent=1 // pred_fallthru
      _
    %s130 = smul.u32 0, 8
    %v131 = vld [vmem:[#allocation3] sm:$0xff]
    %s132 = scalar_lea.vmem [#allocation3], %s130
    %v133 = vld [vmem:[%s132] sm:$0xff]
    %v134 = vlaneseq
    %v135 = vshrl.u32 %v134, 7
    %v136 = vlaneseq
    %v137 = vand.u32 %v136, 127
    %vm138 = vcmp.eq.s32.totalorder %v135, %v137
    %v139 = vsel %vm138, 1.0, 0.0
    %vm140 = vcmask 64512
    %v142 = vsel %vm140, %v139, 0
    %v145 = vsel %vm140, %v133, 0
    %147 = vmatprep.subr.mxu0 0.0
    %v148 = vand.u32 %v145, 4294901760
    %149 = vmatpush1.xpose.msra.mxu0 %v148
    %150 = vmatprep.subr.mxu0 0.0
    %151 = vmatpush1.xpose.msra.mxu0 0.0
    %152 = vmatprep.subr.mxu0 0.0
    %153 = vmatpush1.xpose.msra.mxu0 0.0
    %154 = vmatprep.subr.mxu0 0.0
    %155 = vmatpush1.xpose.msra.mxu0 0.0
    %156 = vmatprep.subr.mxu0 0.0
    %157 = vmatpush1.xpose.msra.mxu0 0.0
    %158 = vmatprep.subr.mxu0 0.0
    %159 = vmatpush1.xpose.msra.mxu0 0.0
    %160 = vmatprep.subr.mxu0 0.0
    %161 = vmatpush1.xpose.msra.mxu0 0.0
    %162 = vmatprep.subr.mxu0 0.0
    %163 = vmatpush1.xpose.msra.mxu0 0.0
    %164 = vmatprep.subr.mxu0 0.0
    %165 = vmatpush1.xpose.msra.mxu0 0.0
    %166 = vmatprep.subr.mxu0 0.0
    %167 = vmatpush1.xpose.msra.mxu0 0.0
    %168 = vmatprep.subr.mxu0 0.0
    %169 = vmatpush1.xpose.msra.mxu0 0.0
    %170 = vmatprep.subr.mxu0 0.0
    %171 = vmatpush1.xpose.msra.mxu0 0.0
    %172 = vmatprep.subr.mxu0 0.0
    %173 = vmatpush1.xpose.msra.mxu0 0.0
    %174 = vmatprep.subr.mxu0 0.0
    %175 = vmatpush1.xpose.msra.mxu0 0.0
    %176 = vmatprep.subr.mxu0 0.0
    %177 = vmatpush1.xpose.msra.mxu0 0.0
    %178 = vmatprep.subr.mxu0 0.0
    %179 = vmatpush1.xpose.msra.mxu0 0.0
    %180 = vmatprep.subr.mxu0 0.0
    %181 = vmatpush1.xpose.msra.mxu0 0.0
    %182 = vmatprep.subr.mxu0 0.0
    %183 = vmatpush1.xpose.msra.mxu0 0.0
    %184 = vmatprep.subr.mxu0 0.0
    %185 = vmatpush1.xpose.msra.mxu0 0.0
    %186 = vmatprep.subr.mxu0 0.0
    %187 = vmatpush1.xpose.msra.mxu0 0.0
    %188 = vmatprep.subr.mxu0 0.0
    %189 = vmatpush1.xpose.msra.mxu0 0.0
    %190 = vmatprep.subr.mxu0 0.0
    %191 = vmatpush1.xpose.msra.mxu0 0.0
    %192 = vmatprep.subr.mxu0 0.0
    %193 = vmatpush1.xpose.msra.mxu0 0.0
    %194 = vmatprep.subr.mxu0 0.0
    %195 = vmatpush1.xpose.msra.mxu0 0.0
    %196 = vmatprep.subr.mxu0 0.0
    %197 = vmatpush1.xpose.msra.mxu0 0.0
    %198 = vmatprep.subr.mxu0 0.0
    %199 = vmatpush1.xpose.msra.mxu0 0.0
    %200 = vmatprep.subr.mxu0 0.0
    %201 = vmatpush1.xpose.msra.mxu0 0.0
    %202 = vmatprep.subr.mxu0 0.0
    %203 = vmatpush1.xpose.msra.mxu0 0.0
    %204 = vmatprep.subr.mxu0 0.0
    %205 = vmatpush1.xpose.msra.mxu0 0.0
    %206 = vmatprep.subr.mxu0 0.0
    %207 = vmatpush1.xpose.msra.mxu0 0.0
    %208 = vmatprep.subr.mxu0 0.0
    %209 = vmatpush1.xpose.msra.mxu0 0.0
    %210 = vmatprep.subr.mxu0 0.0
    %211 = vmatpush1.xpose.msra.mxu0 0.0
    %212 = vmatprep.mubr.f32.mxu0 0.0
    %v213 = vand.u32 %v142, 4294901760
    %v214 = vsub.f32 %v142, %v213
    %v215 = vand.u32 %v214, 4294901760
    %v216 = vsub.f32 %v214, %v215
    %v217 = vand.u32 %v216, 4294901760
    %218 = vmatmul.mubr.f32.gmra.mrb[0].mxu0 %v217
    %v219 = vpop.f32.mrb[0].mxu0
    %v220 = vadd.f32 0.0, %v219
    %v221 = vpop.f32.mrb[0].mxu0
    %222 = vdwg.mxu0
    %223 = vmatprep.subr.mxu0 0.0
    %v224 = vand.u32 %v145, 4294901760
    %v225 = vsub.f32 %v145, %v224
    %v226 = vand.u32 %v225, 4294901760
    %v227 = vsub.f32 %v225, %v226
    %v228 = vand.u32 %v227, 4294901760
    %229 = vmatpush1.xpose.msra.mxu0 %v228
    %230 = vmatprep.subr.mxu0 0.0
    %231 = vmatpush1.xpose.msra.mxu0 0.0
    %232 = vmatprep.subr.mxu0 0.0
    %233 = vmatpush1.xpose.msra.mxu0 0.0
    %234 = vmatprep.subr.mxu0 0.0
    %235 = vmatpush1.xpose.msra.mxu0 0.0
    %236 = vmatprep.subr.mxu0 0.0
    %237 = vmatpush1.xpose.msra.mxu0 0.0
    %238 = vmatprep.subr.mxu0 0.0
    %239 = vmatpush1.xpose.msra.mxu0 0.0
    %240 = vmatprep.subr.mxu0 0.0
    %241 = vmatpush1.xpose.msra.mxu0 0.0
    %242 = vmatprep.subr.mxu0 0.0
    %243 = vmatpush1.xpose.msra.mxu0 0.0
    %244 = vmatprep.subr.mxu0 0.0
    %245 = vmatpush1.xpose.msra.mxu0 0.0
    %246 = vmatprep.subr.mxu0 0.0
    %247 = vmatpush1.xpose.msra.mxu0 0.0
    %248 = vmatprep.subr.mxu0 0.0
    %249 = vmatpush1.xpose.msra.mxu0 0.0
    %250 = vmatprep.subr.mxu0 0.0
    %251 = vmatpush1.xpose.msra.mxu0 0.0
    %252 = vmatprep.subr.mxu0 0.0
    %253 = vmatpush1.xpose.msra.mxu0 0.0
    %254 = vmatprep.subr.mxu0 0.0
    %255 = vmatpush1.xpose.msra.mxu0 0.0
    %256 = vmatprep.subr.mxu0 0.0
    %257 = vmatpush1.xpose.msra.mxu0 0.0
    %258 = vmatprep.subr.mxu0 0.0
    %259 = vmatpush1.xpose.msra.mxu0 0.0
    %260 = vmatprep.subr.mxu0 0.0
    %261 = vmatpush1.xpose.msra.mxu0 0.0
    %262 = vmatprep.subr.mxu0 0.0
    %263 = vmatpush1.xpose.msra.mxu0 0.0
    %264 = vmatprep.subr.mxu0 0.0
    %265 = vmatpush1.xpose.msra.mxu0 0.0
    %266 = vmatprep.subr.mxu0 0.0
    %267 = vmatpush1.xpose.msra.mxu0 0.0
    %268 = vmatprep.subr.mxu0 0.0
    %269 = vmatpush1.xpose.msra.mxu0 0.0
    %270 = vmatprep.subr.mxu0 0.0
    %271 = vmatpush1.xpose.msra.mxu0 0.0
    %272 = vmatprep.subr.mxu0 0.0
    %273 = vmatpush1.xpose.msra.mxu0 0.0
    %274 = vmatprep.subr.mxu0 0.0
    %275 = vmatpush1.xpose.msra.mxu0 0.0
    %276 = vmatprep.subr.mxu0 0.0
    %277 = vmatpush1.xpose.msra.mxu0 0.0
    %278 = vmatprep.subr.mxu0 0.0
    %279 = vmatpush1.xpose.msra.mxu0 0.0
    %280 = vmatprep.subr.mxu0 0.0
    %281 = vmatpush1.xpose.msra.mxu0 0.0
    %282 = vmatprep.subr.mxu0 0.0
    %283 = vmatpush1.xpose.msra.mxu0 0.0
    %284 = vmatprep.subr.mxu0 0.0
    %285 = vmatpush1.xpose.msra.mxu0 0.0
    %286 = vmatprep.subr.mxu0 0.0
    %287 = vmatpush1.xpose.msra.mxu0 0.0
    %288 = vmatprep.subr.mxu0 0.0
    %289 = vmatpush1.xpose.msra.mxu0 0.0
    %290 = vmatprep.subr.mxu0 0.0
    %291 = vmatpush1.xpose.msra.mxu0 0.0
    %292 = vmatprep.mubr.f32.mxu0 0.0
    %v293 = vand.u32 %v142, 4294901760
    %294 = vmatmul.mubr.f32.gmra.mrb[0].mxu0 %v293
    %v295 = vpop.f32.mrb[0].mxu0
    %v296 = vadd.f32 %v220, %v295
    %v297 = vpop.f32.mrb[0].mxu0
    %298 = vdwg.mxu0
    %299 = vmatprep.subr.mxu0 0.0
    %v300 = vand.u32 %v145, 4294901760
    %v301 = vsub.f32 %v145, %v300
    %302 = vmatpush1.xpose.msra.mxu0 %v301
    %303 = vmatprep.subr.mxu0 0.0
    %304 = vmatpush1.xpose.msra.mxu0 0.0
    %305 = vmatprep.subr.mxu0 0.0
    %306 = vmatpush1.xpose.msra.mxu0 0.0
    %307 = vmatprep.subr.mxu0 0.0
    %308 = vmatpush1.xpose.msra.mxu0 0.0
    %309 = vmatprep.subr.mxu0 0.0
    %310 = vmatpush1.xpose.msra.mxu0 0.0
    %311 = vmatprep.subr.mxu0 0.0
    %312 = vmatpush1.xpose.msra.mxu0 0.0
    %313 = vmatprep.subr.mxu0 0.0
    %314 = vmatpush1.xpose.msra.mxu0 0.0
    %315 = vmatprep.subr.mxu0 0.0
    %316 = vmatpush1.xpose.msra.mxu0 0.0
    %317 = vmatprep.subr.mxu0 0.0
    %318 = vmatpush1.xpose.msra.mxu0 0.0
    %319 = vmatprep.subr.mxu0 0.0
    %320 = vmatpush1.xpose.msra.mxu0 0.0
    %321 = vmatprep.subr.mxu0 0.0
    %322 = vmatpush1.xpose.msra.mxu0 0.0
    %323 = vmatprep.subr.mxu0 0.0
    %324 = vmatpush1.xpose.msra.mxu0 0.0
    %325 = vmatprep.subr.mxu0 0.0
    %326 = vmatpush1.xpose.msra.mxu0 0.0
    %327 = vmatprep.subr.mxu0 0.0
    %328 = vmatpush1.xpose.msra.mxu0 0.0
    %329 = vmatprep.subr.mxu0 0.0
    %330 = vmatpush1.xpose.msra.mxu0 0.0
    %331 = vmatprep.subr.mxu0 0.0
    %332 = vmatpush1.xpose.msra.mxu0 0.0
    %333 = vmatprep.subr.mxu0 0.0
    %334 = vmatpush1.xpose.msra.mxu0 0.0
    %335 = vmatprep.subr.mxu0 0.0
    %336 = vmatpush1.xpose.msra.mxu0 0.0
    %337 = vmatprep.subr.mxu0 0.0
    %338 = vmatpush1.xpose.msra.mxu0 0.0
    %339 = vmatprep.subr.mxu0 0.0
    %340 = vmatpush1.xpose.msra.mxu0 0.0
    %341 = vmatprep.subr.mxu0 0.0
    %342 = vmatpush1.xpose.msra.mxu0 0.0
    %343 = vmatprep.subr.mxu0 0.0
    %344 = vmatpush1.xpose.msra.mxu0 0.0
    %345 = vmatprep.subr.mxu0 0.0
    %346 = vmatpush1.xpose.msra.mxu0 0.0
    %347 = vmatprep.subr.mxu0 0.0
    %348 = vmatpush1.xpose.msra.mxu0 0.0
    %349 = vmatprep.subr.mxu0 0.0
    %350 = vmatpush1.xpose.msra.mxu0 0.0
    %351 = vmatprep.subr.mxu0 0.0
    %352 = vmatpush1.xpose.msra.mxu0 0.0
    %353 = vmatprep.subr.mxu0 0.0
    %354 = vmatpush1.xpose.msra.mxu0 0.0
    %355 = vmatprep.subr.mxu0 0.0
    %356 = vmatpush1.xpose.msra.mxu0 0.0
    %357 = vmatprep.subr.mxu0 0.0
    %358 = vmatpush1.xpose.msra.mxu0 0.0
    %359 = vmatprep.subr.mxu0 0.0
    %360 = vmatpush1.xpose.msra.mxu0 0.0
    %361 = vmatprep.subr.mxu0 0.0
    %362 = vmatpush1.xpose.msra.mxu0 0.0
    %363 = vmatprep.subr.mxu0 0.0
    %364 = vmatpush1.xpose.msra.mxu0 0.0
    %365 = vmatprep.mubr.f32.mxu0 0.0
    %v366 = vand.u32 %v142, 4294901760
    %v367 = vsub.f32 %v142, %v366
    %368 = vmatmul.mubr.f32.gmra.mrb[0].mxu0 %v367
    %v369 = vpop.f32.mrb[0].mxu0
    %v370 = vadd.f32 %v296, %v369
    %v371 = vpop.f32.mrb[0].mxu0
    %372 = vdwg.mxu0
    %373 = vmatprep.subr.mxu0 0.0
    %v374 = vand.u32 %v145, 4294901760
    %375 = vmatpush1.xpose.msra.mxu0 %v374
    %376 = vmatprep.subr.mxu0 0.0
    %377 = vmatpush1.xpose.msra.mxu0 0.0
    %378 = vmatprep.subr.mxu0 0.0
    %379 = vmatpush1.xpose.msra.mxu0 0.0
    %380 = vmatprep.subr.mxu0 0.0
    %381 = vmatpush1.xpose.msra.mxu0 0.0
    %382 = vmatprep.subr.mxu0 0.0
    %383 = vmatpush1.xpose.msra.mxu0 0.0
    %384 = vmatprep.subr.mxu0 0.0
    %385 = vmatpush1.xpose.msra.mxu0 0.0
    %386 = vmatprep.subr.mxu0 0.0
    %387 = vmatpush1.xpose.msra.mxu0 0.0
    %388 = vmatprep.subr.mxu0 0.0
    %389 = vmatpush1.xpose.msra.mxu0 0.0
    %390 = vmatprep.subr.mxu0 0.0
    %391 = vmatpush1.xpose.msra.mxu0 0.0
    %392 = vmatprep.subr.mxu0 0.0
    %393 = vmatpush1.xpose.msra.mxu0 0.0
    %394 = vmatprep.subr.mxu0 0.0
    %395 = vmatpush1.xpose.msra.mxu0 0.0
    %396 = vmatprep.subr.mxu0 0.0
    %397 = vmatpush1.xpose.msra.mxu0 0.0
    %398 = vmatprep.subr.mxu0 0.0
    %399 = vmatpush1.xpose.msra.mxu0 0.0
    %400 = vmatprep.subr.mxu0 0.0
    %401 = vmatpush1.xpose.msra.mxu0 0.0
    %402 = vmatprep.subr.mxu0 0.0
    %403 = vmatpush1.xpose.msra.mxu0 0.0
    %404 = vmatprep.subr.mxu0 0.0
    %405 = vmatpush1.xpose.msra.mxu0 0.0
    %406 = vmatprep.subr.mxu0 0.0
    %407 = vmatpush1.xpose.msra.mxu0 0.0
    %408 = vmatprep.subr.mxu0 0.0
    %409 = vmatpush1.xpose.msra.mxu0 0.0
    %410 = vmatprep.subr.mxu0 0.0
    %411 = vmatpush1.xpose.msra.mxu0 0.0
    %412 = vmatprep.subr.mxu0 0.0
    %413 = vmatpush1.xpose.msra.mxu0 0.0
    %414 = vmatprep.subr.mxu0 0.0
    %415 = vmatpush1.xpose.msra.mxu0 0.0
    %416 = vmatprep.subr.mxu0 0.0
    %417 = vmatpush1.xpose.msra.mxu0 0.0
    %418 = vmatprep.subr.mxu0 0.0
    %419 = vmatpush1.xpose.msra.mxu0 0.0
    %420 = vmatprep.subr.mxu0 0.0
    %421 = vmatpush1.xpose.msra.mxu0 0.0
    %422 = vmatprep.subr.mxu0 0.0
    %423 = vmatpush1.xpose.msra.mxu0 0.0
    %424 = vmatprep.subr.mxu0 0.0
    %425 = vmatpush1.xpose.msra.mxu0 0.0
    %426 = vmatprep.subr.mxu0 0.0
    %427 = vmatpush1.xpose.msra.mxu0 0.0
    %428 = vmatprep.subr.mxu0 0.0
    %429 = vmatpush1.xpose.msra.mxu0 0.0
    %430 = vmatprep.subr.mxu0 0.0
    %431 = vmatpush1.xpose.msra.mxu0 0.0
    %432 = vmatprep.subr.mxu0 0.0
    %433 = vmatpush1.xpose.msra.mxu0 0.0
    %434 = vmatprep.subr.mxu0 0.0
    %435 = vmatpush1.xpose.msra.mxu0 0.0
    %436 = vmatprep.subr.mxu0 0.0
    %437 = vmatpush1.xpose.msra.mxu0 0.0
    %438 = vmatprep.mubr.f32.mxu0 0.0
    %v439 = vand.u32 %v142, 4294901760
    %v440 = vsub.f32 %v142, %v439
    %v441 = vand.u32 %v440, 4294901760
    %442 = vmatmul.mubr.f32.gmra.mrb[0].mxu0 %v441
    %v443 = vpop.f32.mrb[0].mxu0
    %v444 = vadd.f32 %v370, %v443
    %v445 = vpop.f32.mrb[0].mxu0
    %446 = vdwg.mxu0
    %447 = vmatprep.subr.mxu0 0.0
    %v448 = vand.u32 %v145, 4294901760
    %v449 = vsub.f32 %v145, %v448
    %v450 = vand.u32 %v449, 4294901760
    %451 = vmatpush1.xpose.msra.mxu0 %v450
    %452 = vmatprep.subr.mxu0 0.0
    %453 = vmatpush1.xpose.msra.mxu0 0.0
    %454 = vmatprep.subr.mxu0 0.0
    %455 = vmatpush1.xpose.msra.mxu0 0.0
    %456 = vmatprep.subr.mxu0 0.0
    %457 = vmatpush1.xpose.msra.mxu0 0.0
    %458 = vmatprep.subr.mxu0 0.0
    %459 = vmatpush1.xpose.msra.mxu0 0.0
    %460 = vmatprep.subr.mxu0 0.0
    %461 = vmatpush1.xpose.msra.mxu0 0.0
    %462 = vmatprep.subr.mxu0 0.0
    %463 = vmatpush1.xpose.msra.mxu0 0.0
    %464 = vmatprep.subr.mxu0 0.0
    %465 = vmatpush1.xpose.msra.mxu0 0.0
    %466 = vmatprep.subr.mxu0 0.0
    %467 = vmatpush1.xpose.msra.mxu0 0.0
    %468 = vmatprep.subr.mxu0 0.0
    %469 = vmatpush1.xpose.msra.mxu0 0.0
    %470 = vmatprep.subr.mxu0 0.0
    %471 = vmatpush1.xpose.msra.mxu0 0.0
    %472 = vmatprep.subr.mxu0 0.0
    %473 = vmatpush1.xpose.msra.mxu0 0.0
    %474 = vmatprep.subr.mxu0 0.0
    %475 = vmatpush1.xpose.msra.mxu0 0.0
    %476 = vmatprep.subr.mxu0 0.0
    %477 = vmatpush1.xpose.msra.mxu0 0.0
    %478 = vmatprep.subr.mxu0 0.0
    %479 = vmatpush1.xpose.msra.mxu0 0.0
    %480 = vmatprep.subr.mxu0 0.0
    %481 = vmatpush1.xpose.msra.mxu0 0.0
    %482 = vmatprep.subr.mxu0 0.0
    %483 = vmatpush1.xpose.msra.mxu0 0.0
    %484 = vmatprep.subr.mxu0 0.0
    %485 = vmatpush1.xpose.msra.mxu0 0.0
    %486 = vmatprep.subr.mxu0 0.0
    %487 = vmatpush1.xpose.msra.mxu0 0.0
    %488 = vmatprep.subr.mxu0 0.0
    %489 = vmatpush1.xpose.msra.mxu0 0.0
    %490 = vmatprep.subr.mxu0 0.0
    %491 = vmatpush1.xpose.msra.mxu0 0.0
    %492 = vmatprep.subr.mxu0 0.0
    %493 = vmatpush1.xpose.msra.mxu0 0.0
    %494 = vmatprep.subr.mxu0 0.0
    %495 = vmatpush1.xpose.msra.mxu0 0.0
    %496 = vmatprep.subr.mxu0 0.0
    %497 = vmatpush1.xpose.msra.mxu0 0.0
    %498 = vmatprep.subr.mxu0 0.0
    %499 = vmatpush1.xpose.msra.mxu0 0.0
    %500 = vmatprep.subr.mxu0 0.0
    %501 = vmatpush1.xpose.msra.mxu0 0.0
    %502 = vmatprep.subr.mxu0 0.0
    %503 = vmatpush1.xpose.msra.mxu0 0.0
    %504 = vmatprep.subr.mxu0 0.0
    %505 = vmatpush1.xpose.msra.mxu0 0.0
    %506 = vmatprep.subr.mxu0 0.0
    %507 = vmatpush1.xpose.msra.mxu0 0.0
    %508 = vmatprep.subr.mxu0 0.0
    %509 = vmatpush1.xpose.msra.mxu0 0.0
    %510 = vmatprep.subr.mxu0 0.0
    %511 = vmatpush1.xpose.msra.mxu0 0.0
    %512 = vmatprep.subr.mxu0 0.0
    %513 = vmatpush1.xpose.msra.mxu0 0.0
    %514 = vmatprep.mubr.f32.mxu0 0.0
    %v515 = vand.u32 %v142, 4294901760
    %516 = vmatmul.mubr.f32.gmra.mrb[0].mxu0 %v515
    %v517 = vpop.f32.mrb[0].mxu0
    %v518 = vadd.f32 %v444, %v517
    %v519 = vpop.f32.mrb[0].mxu0
    %520 = vdwg.mxu0
    %521 = vmatprep.subr.mxu0 0.0
    %v522 = vand.u32 %v145, 4294901760
    %523 = vmatpush1.xpose.msra.mxu0 %v522
    %524 = vmatprep.subr.mxu0 0.0
    %525 = vmatpush1.xpose.msra.mxu0 0.0
    %526 = vmatprep.subr.mxu0 0.0
    %527 = vmatpush1.xpose.msra.mxu0 0.0
    %528 = vmatprep.subr.mxu0 0.0
    %529 = vmatpush1.xpose.msra.mxu0 0.0
    %530 = vmatprep.subr.mxu0 0.0
    %531 = vmatpush1.xpose.msra.mxu0 0.0
    %532 = vmatprep.subr.mxu0 0.0
    %533 = vmatpush1.xpose.msra.mxu0 0.0
    %534 = vmatprep.subr.mxu0 0.0
    %535 = vmatpush1.xpose.msra.mxu0 0.0
    %536 = vmatprep.subr.mxu0 0.0
    %537 = vmatpush1.xpose.msra.mxu0 0.0
    %538 = vmatprep.subr.mxu0 0.0
    %539 = vmatpush1.xpose.msra.mxu0 0.0
    %540 = vmatprep.subr.mxu0 0.0
    %541 = vmatpush1.xpose.msra.mxu0 0.0
    %542 = vmatprep.subr.mxu0 0.0
    %543 = vmatpush1.xpose.msra.mxu0 0.0
    %544 = vmatprep.subr.mxu0 0.0
    %545 = vmatpush1.xpose.msra.mxu0 0.0
    %546 = vmatprep.subr.mxu0 0.0
    %547 = vmatpush1.xpose.msra.mxu0 0.0
    %548 = vmatprep.subr.mxu0 0.0
    %549 = vmatpush1.xpose.msra.mxu0 0.0
    %550 = vmatprep.subr.mxu0 0.0
    %551 = vmatpush1.xpose.msra.mxu0 0.0
    %552 = vmatprep.subr.mxu0 0.0
    %553 = vmatpush1.xpose.msra.mxu0 0.0
    %554 = vmatprep.subr.mxu0 0.0
    %555 = vmatpush1.xpose.msra.mxu0 0.0
    %556 = vmatprep.subr.mxu0 0.0
    %557 = vmatpush1.xpose.msra.mxu0 0.0
    %558 = vmatprep.subr.mxu0 0.0
    %559 = vmatpush1.xpose.msra.mxu0 0.0
    %560 = vmatprep.subr.mxu0 0.0
    %561 = vmatpush1.xpose.msra.mxu0 0.0
    %562 = vmatprep.subr.mxu0 0.0
    %563 = vmatpush1.xpose.msra.mxu0 0.0
    %564 = vmatprep.subr.mxu0 0.0
    %565 = vmatpush1.xpose.msra.mxu0 0.0
    %566 = vmatprep.subr.mxu0 0.0
    %567 = vmatpush1.xpose.msra.mxu0 0.0
    %568 = vmatprep.subr.mxu0 0.0
    %569 = vmatpush1.xpose.msra.mxu0 0.0
    %570 = vmatprep.subr.mxu0 0.0
    %571 = vmatpush1.xpose.msra.mxu0 0.0
    %572 = vmatprep.subr.mxu0 0.0
    %573 = vmatpush1.xpose.msra.mxu0 0.0
    %574 = vmatprep.subr.mxu0 0.0
    %575 = vmatpush1.xpose.msra.mxu0 0.0
    %576 = vmatprep.subr.mxu0 0.0
    %577 = vmatpush1.xpose.msra.mxu0 0.0
    %578 = vmatprep.subr.mxu0 0.0
    %579 = vmatpush1.xpose.msra.mxu0 0.0
    %580 = vmatprep.subr.mxu0 0.0
    %581 = vmatpush1.xpose.msra.mxu0 0.0
    %582 = vmatprep.subr.mxu0 0.0
    %583 = vmatpush1.xpose.msra.mxu0 0.0
    %584 = vmatprep.subr.mxu0 0.0
    %585 = vmatpush1.xpose.msra.mxu0 0.0
    %586 = vmatprep.mubr.f32.mxu0 0.0
    %v587 = vand.u32 %v142, 4294901760
    %588 = vmatmul.mubr.f32.gmra.mrb[0].mxu0 %v587
    %v589 = vpop.f32.mrb[0].mxu0
    %v590 = vadd.f32 %v518, %v589
    %v591 = vpop.f32.mrb[0].mxu0
    %592 = vdwg.mxu0
    %v593 = vld [vmem:[%s1] sm:$0xff]
    %594 = vset.pattern.permute.xlu0 0
    %595 = vperm.xlu0 %594, %v593
    %v596 = vpop.permute.xlu0 %595
    %vm597 = vcmp.le.s32.totalorder %v137, %v596
    %v598 = vsel %vm597, 1.0, 0.0
    %s599 = scalar_lea.vmem [#allocation2], %s130
    %v600 = vld [vmem:[%s599] sm:$0xff]
    %601 = vmatprep.subr.mxu0 0.0
    %602 = vmatpush1.xpose.msra.mxu0 %v600
    %603 = vmatprep.subr.mxu0 0.0
    %604 = vmatpush1.xpose.msra.mxu0 0.0
    %605 = vmatprep.subr.mxu0 0.0
    %606 = vmatpush1.xpose.msra.mxu0 0.0
    %607 = vmatprep.subr.mxu0 0.0
    %608 = vmatpush1.xpose.msra.mxu0 0.0
    %609 = vmatprep.subr.mxu0 0.0
    %610 = vmatpush1.xpose.msra.mxu0 0.0
    %611 = vmatprep.subr.mxu0 0.0
    %612 = vmatpush1.xpose.msra.mxu0 0.0
    %613 = vmatprep.subr.mxu0 0.0
    %614 = vmatpush1.xpose.msra.mxu0 0.0
    %615 = vmatprep.subr.mxu0 0.0
    %616 = vmatpush1.xpose.msra.mxu0 0.0
    %617 = vmatprep.subr.mxu0 0.0
    %618 = vmatpush1.xpose.msra.mxu0 0.0
    %619 = vmatprep.subr.mxu0 0.0
    %620 = vmatpush1.xpose.msra.mxu0 0.0
    %621 = vmatprep.subr.mxu0 0.0
    %622 = vmatpush1.xpose.msra.mxu0 0.0
    %623 = vmatprep.subr.mxu0 0.0
    %624 = vmatpush1.xpose.msra.mxu0 0.0
    %625 = vmatprep.subr.mxu0 0.0
    %626 = vmatpush1.xpose.msra.mxu0 0.0
    %627 = vmatprep.subr.mxu0 0.0
    %628 = vmatpush1.xpose.msra.mxu0 0.0
    %629 = vmatprep.subr.mxu0 0.0
    %630 = vmatpush1.xpose.msra.mxu0 0.0
    %631 = vmatprep.subr.mxu0 0.0
    %632 = vmatpush1.xpose.msra.mxu0 0.0
    %633 = vmatprep.subr.mxu0 0.0
    %634 = vmatpush1.xpose.msra.mxu0 0.0
    %635 = vmatprep.subr.mxu0 0.0
    %636 = vmatpush1.xpose.msra.mxu0 0.0
    %637 = vmatprep.subr.mxu0 0.0
    %638 = vmatpush1.xpose.msra.mxu0 0.0
    %639 = vmatprep.subr.mxu0 0.0
    %640 = vmatpush1.xpose.msra.mxu0 0.0
    %641 = vmatprep.subr.mxu0 0.0
    %642 = vmatpush1.xpose.msra.mxu0 0.0
    %643 = vmatprep.subr.mxu0 0.0
    %644 = vmatpush1.xpose.msra.mxu0 0.0
    %645 = vmatprep.subr.mxu0 0.0
    %646 = vmatpush1.xpose.msra.mxu0 0.0
    %647 = vmatprep.subr.mxu0 0.0
    %648 = vmatpush1.xpose.msra.mxu0 0.0
    %649 = vmatprep.subr.mxu0 0.0
    %650 = vmatpush1.xpose.msra.mxu0 0.0
    %651 = vmatprep.subr.mxu0 0.0
    %652 = vmatpush1.xpose.msra.mxu0 0.0
    %653 = vmatprep.subr.mxu0 0.0
    %654 = vmatpush1.xpose.msra.mxu0 0.0
    %655 = vmatprep.subr.mxu0 0.0
    %656 = vmatpush1.xpose.msra.mxu0 0.0
    %657 = vmatprep.subr.mxu0 0.0
    %658 = vmatpush1.xpose.msra.mxu0 0.0
    %659 = vmatprep.subr.mxu0 0.0
    %660 = vmatpush1.xpose.msra.mxu0 0.0
    %661 = vmatprep.subr.mxu0 0.0
    %662 = vmatpush1.xpose.msra.mxu0 0.0
    %663 = vmatprep.subr.mxu0 0.0
    %664 = vmatpush1.xpose.msra.mxu0 0.0
    %665 = vmatprep.mubr.f32.mxu0 0.0
    %666 = vmatmul.mubr.f32.gmra.mrb[0].mxu0 %v598
    %v667 = vpop.f32.mrb[0].mxu0
    %v668 = vadd.f32 0.0, %v667
    %v669 = vpop.f32.mrb[0].mxu0
    %670 = vdwg.mxu0
    %672 = vset.pattern.permute.xlu0 1
    %673 = vperm.xlu0 %672, %v131
    %v674 = vpop.permute.xlu0 %673
    %v676 = vlaneseq
    %v677 = vshrl.u32 %v676, 7
    %v678 = vsub.s32 1, %v677
    %v679 = vrot.slane %v590, %v678
    %vm680 = vcmp.lt.f32.partialorder %v674, %v679
    %vm681 = vcmp.eq.f32.partialorder %v674, %v679
    %vm682 = vcmp.eq.f32.partialorder %v590, 0.0
    %v683 = vsel %vm682, 1, 0
    %v684 = vlaneseq
    %v685 = vshrl.u32 %v684, 7
    %v686 = vsub.s32 2, %v685
    %v687 = vrot.slane %v683, %v686
    %vm688 = vcmp.eq.s32.totalorder %v687, 1
    %vm689 = vmand %vm681, %vm688
    %vm690 = vmor %vm680, %vm689
    %691 = vset.pattern.permute.xlu0 2
    %692 = vperm.xlu0 %691, %v131
    %v693 = vpop.permute.xlu0 %692
    %v695 = vsel %vm690, %v693, 0.0
    %v696 = vld [vmem:[#allocation5] sm:$0x1]
    %697 = vset.pattern.permute.xlu0 3
    %698 = vperm.xlu0 %697, %v131
    %v699 = vpop.permute.xlu0 %698
    %v701 = vsub.f32 %v668, %v699
    %v702 = vmul.f32 %v701, 10.0
    %v703 = vmul.f32 %v702, 1.442695
    %v704 = vpow.pop %v703
    %v705 = vmul.f32 %v695, %v704
    %v706 = vsel %vm140, %v705, 0.0
    %707 = vadd.xlane.f32.xlu0 %v706
    %v708 = vpop.xlane.xlu0 %707
    %v709 = vrot.slane %v708, 4
    %v710 = vadd.f32 %v708, %v709
    %v711 = vrot.slane %v710, 2
    %v712 = vadd.f32 %v710, %v711
    %v713 = vrot.slane %v712, 1
    %v714 = vadd.f32 %v712, %v713
    %s715 = vtos %v714
    %v716 = vstv %s715
    %v717 = vadd.f32 %v696, %v716
    %vm718 = vcmask 0
    %719 = vst.msk [vmem:[#allocation5] sm:$0x1] %vm718, %v717
    %v720 = vld [vmem:[#allocation6] sm:$0x1]
    %721 = vset.pattern.permute.xlu0 0
    %722 = vperm.xlu0 %721, %v131
    %v723 = vpop.permute.xlu0 %722
    %v725 = vlaneseq
    %v726 = vshrl.u32 %v725, 7
    %v727 = vsub.s32 0, %v726
    %v728 = vrot.slane %v590, %v727
    %vm729 = vcmp.lt.f32.partialorder %v723, %v728
    %vm730 = vcmp.eq.f32.partialorder %v723, %v728
    %v731 = vmul.f32 %v131, 0.5
    %733 = vset.pattern.permute.xlu0 2
    %734 = vperm.xlu0 %733, %v731
    %v735 = vpop.permute.xlu0 %734
    %v737 = vsel %vm730, %v735, 0.0
    %v738 = vsel %vm729, %v693, %v737
    %v739 = vsel %vm680, %v738, 0.0
    %v740 = vsel %vm140, %v739, 0.0
    %741 = vadd.xlane.f32.xlu0 %v740
    %v742 = vpop.xlane.xlu0 %741
    %v743 = vrot.slane %v742, 4
    %v744 = vadd.f32 %v742, %v743
    %v745 = vrot.slane %v744, 2
    %v746 = vadd.f32 %v744, %v745
    %v747 = vrot.slane %v746, 1
    %v748 = vadd.f32 %v746, %v747
    %s749 = vtos %v748
    %v750 = vstv %s749
    %v751 = vadd.f32 %v720, %v750
    %752 = vst.msk [vmem:[#allocation6] sm:$0x1] %vm718, %v751
    %v753 = vld [vmem:[#allocation7] sm:$0x1]
    %v754 = vsel %vm680, %v693, 0.0
    %v755 = vsel %vm140, %v754, 0.0
    %756 = vadd.xlane.f32.xlu0 %v755
    %v757 = vpop.xlane.xlu0 %756
    %v758 = vrot.slane %v757, 4
    %v759 = vadd.f32 %v757, %v758
    %v760 = vrot.slane %v759, 2
    %v761 = vadd.f32 %v759, %v760
    %v762 = vrot.slane %v761, 1
    %v763 = vadd.f32 %v761, %v762
    %s764 = vtos %v763
    %v765 = vstv %s764
    %v766 = vadd.f32 %v753, %v765
    %767 = vst.msk [vmem:[#allocation7] sm:$0x1] %vm718, %v766
    // Predicated region
    $region22: #{loss_forward.1} parent=1 // pred_check
      %p768 = pneg %p20
    $region23: #{loss_forward.1} parent=1 // pred_check_branch
      %770 = sbr.rel (%p768) target = $region25
    $region24: #{loss_forward.1} parent=1 // pred_region
      %v771 = vld [vmem:[#allocation5] sm:$0x1]
      %v772 = vmul.f32 %v771, 0.015625
      %v773 = vld [vmem:[#allocation4] sm:$0x1]
      %v774 = vmul.f32 %v773, 0.5
      %v775 = vmul.f32 %v772, 0.5
      %v776 = vadd.f32 %v774, %v775
      %v777 = vld [vmem:[#allocation6] sm:$0x1]
      %v778 = vld [vmem:[#allocation7] sm:$0x1]
      %v779 = vmax.f32 %v778, 1.0
      %v780 = vrcp.pop %v779
      %v781 = vmul.f32 %v777, %v780
      %vm782 = vcmp.eq.s32.totalorder %v137, 0
      %vm783 = vcmp.eq.s32.totalorder %v137, 1
      %785 = vset.pattern.permute.xlu0 0
      %786 = vperm.xlu0 %785, %v781
      %v787 = vpop.permute.xlu0 %786
      %v789 = vlaneseq
      %v790 = vshrl.u32 %v789, 7
      %v791 = vsub.s32 0, %v790
      %v792 = vrot.slane %v787, %v791
      %v793 = vsel %vm783, %v792, 0.0
      %795 = vset.pattern.permute.xlu0 0
      %796 = vperm.xlu0 %795, %v776
      %v797 = vpop.permute.xlu0 %796
      %v799 = vlaneseq
      %v800 = vshrl.u32 %v799, 7
      %v801 = vsub.s32 0, %v800
      %v802 = vrot.slane %v797, %v801
      %v803 = vsel %vm782, %v802, %v793
      %804 = vst [vmem:[%s4] sm:$0x1] %v803
    $region25: #{loss_forward.1} parent=1 // pred_fallthru
      _
    // Predicated region
    $region26: #{loss_forward.1} parent=1 // pred_check
      _
    $region27: #{loss_forward.1} parent=1 // pred_check_branch
      %806 = sbr.rel (0) target = $region29
    $region28: #{loss_forward.1} parent=1 // pred_region
      _
    $region29: #{loss_forward.1} parent=1 // pred_fallthru
      _
    // Predicated region
    $region30: #{loss_forward.1} parent=1 // pred_check
      _
    $region31: #{loss_forward.1} parent=1 // pred_check_branch
      %808 = sbr.rel (0) target = $region33
    $region32: #{loss_forward.1} parent=1 // pred_region
      %s810 = ssub.s32 128, 128
      %811 = vsyncadd [#allocation9], %s810
      %s813 = sshll.u32 [#allocation8], 4
      %s814 = int_to_ptr.vmem [resolvable:$true] %s813
      %816 = dma.vmem_to_hbm [thread:$0]  %s814, 128, %s5, [#allocation9]
    $region33: #{loss_forward.1} parent=1 // pred_fallthru
      _
    // Predicated region
    $region34: #{loss_forward.1} parent=1 // pred_check
      _
    $region35: #{loss_forward.1} parent=1 // pred_check_branch
      %818 = sbr.rel (0) target = $region37
    $region36: #{loss_forward.1} parent=1 // pred_region
      _
    $region37: #{loss_forward.1} parent=1 // pred_fallthru
      _
    // Predicated region
    $region38: #{loss_forward.1} parent=1 // pred_check
      _
    $region39: #{loss_forward.1} parent=1 // pred_check_branch
      %820 = sbr.rel (0) target = $region41
    $region40: #{loss_forward.1} parent=1 // pred_region
      %821 = dma.done [#allocation9], 128
    $region41: #{loss_forward.1} parent=1 // pred_fallthru
      _
    %822 = vsyncpa [#allocation9], 1

</llo_original>
